<compile_context>
chip_gen: v6e
topology: v6e:2x2x1
jax: 0.10.0
libtpu: 0.0.40
codegen_flags: <defaults>
</compile_context>

<pallas_src>
import jax
import jax.numpy as jnp
from jax.experimental import pallas as pl
from jax.experimental.pallas import tpu as pltpu

VMEM_LIMIT_BYTES = 64 * 1024 * 1024


# ----------------------------------------------------------------------------
# Helpers
# ----------------------------------------------------------------------------
def _row_block(rows, target=512):
    """Row block for the projection matmuls: divides `rows`, multiple of 8."""
    if rows <= target:
        return rows
    for blk in range(target, 7, -8):
        if rows % blk == 0:
            return blk
    return rows


def _time_block(seq_len, max_blk=16):
    """Timesteps processed per grid step of the recurrence kernel."""
    for blk in range(min(seq_len, max_blk), 0, -1):
        if seq_len % blk == 0:
            return blk
    return 1


# ----------------------------------------------------------------------------
# Pallas kernels
# ----------------------------------------------------------------------------
def proj_kernel(x_ref, w_ref, b_ref, gif_ref, gib_ref):
    """gi = x @ W_ih + b_ih for both directions at once.

    x_ref  : (R_BLK, Din)     rows = flattened (seq, batch)
    w_ref  : (Din, 6H)        [:, :3H] fwd, [:, 3H:] bwd (gate order r,z,n)
    b_ref  : (1, 6H)  f32
    gif_ref: (R_BLK, 3H) f32  forward-direction input gates
    gib_ref: (R_BLK, 3H) f32  backward-direction input gates
    """
    g3 = gif_ref.shape[-1]
    y = jnp.dot(x_ref[...], w_ref[...],
                preferred_element_type=jnp.float32) + b_ref[...]
    gif_ref[...] = y[:, :g3]
    gib_ref[...] = y[:, g3:]


def proj2_kernel(xf_ref, xb_ref, w_ref, b_ref, gif_ref, gib_ref):
    """Projection for layers > 0: input is the previous layer's (out_f, out_b)
    pair kept as two arrays (no concat HBM pass):
        gi = out_f @ W_ih[:H] + out_b @ W_ih[H:] + b_ih
    w_ref: (2, H, 6H) with w_ref[0] = W_ih[:H], w_ref[1] = W_ih[H:].
    """
    g3 = gif_ref.shape[-1]
    y = (jnp.dot(xf_ref[...], w_ref[0], preferred_element_type=jnp.float32)
         + jnp.dot(xb_ref[...], w_ref[1], preferred_element_type=jnp.float32)
         + b_ref[...])
    gif_ref[...] = y[:, :g3]
    gib_ref[...] = y[:, g3:]


def gru_bidir_kernel(gif_ref, gib_ref, whh_ref, bhh_ref,
                     outf_ref, outb_ref, hf_sc, hb_sc):
    """Fused forward+backward GRU recurrence over one block of T_BLK steps.

    Grid axis 0 = time blocks (sequential -> "arbitrary").
    gif_ref : (T_BLK, B, 3H) f32  fwd input gates, block t
    gib_ref : (T_BLK, B, 3H) f32  bwd input gates, block (nblk-1-t)
    whh_ref : (2, H, 3H)          hidden->gates weights (0=fwd, 1=bwd)
    bhh_ref : (2, 3H)  f32        hidden biases         (0=fwd, 1=bwd)
    outf_ref: (T_BLK, B, H)       fwd hidden states for block t
    outb_ref: (T_BLK, B, H)       bwd hidden states for block (nblk-1-t)
    hf_sc, hb_sc: (B, H) f32      recurrent state, persists across grid steps
    """
    t = pl.program_id(0)
    t_blk = gif_ref.shape[0]
    hid = hf_sc.shape[-1]
    cdt = whh_ref.dtype

    @pl.when(t == 0)
    def _():
        hf_sc[...] = jnp.zeros_like(hf_sc)
        hb_sc[...] = jnp.zeros_like(hb_sc)

    whh_f = whh_ref[0]
    whh_b = whh_ref[1]
    bhh_f = bhh_ref[0:1, :]
    bhh_b = bhh_ref[1:2, :]

    def cell(gi, h, whh, bhh):
        gh = jnp.dot(h.astype(cdt), whh,
                     preferred_element_type=jnp.float32) + bhh
        r = jax.nn.sigmoid(gi[:, 0 * hid:1 * hid] + gh[:, 0 * hid:1 * hid])
        z = jax.nn.sigmoid(gi[:, 1 * hid:2 * hid] + gh[:, 1 * hid:2 * hid])
        n = jnp.tanh(gi[:, 2 * hid:3 * hid] + r * gh[:, 2 * hid:3 * hid])
        return (1.0 - z) * n + z * h

    hf = hf_sc[...]
    hb = hb_sc[...]
    # Statically unrolled loop over T_BLK timesteps amortizes the ~600-cycle
    # per-grid-step overhead; all VMEM indices are static.
    for j in range(t_blk):
        jb = t_blk - 1 - j
        hf = cell(gif_ref[j], hf, whh_f, bhh_f)
        outf_ref[j] = hf.astype(outf_ref.dtype)
        hb = cell(gib_ref[jb], hb, whh_b, bhh_b)
        outb_ref[jb] = hb.astype(outb_ref.dtype)

    hf_sc[...] = hf
    hb_sc[...] = hb


def head_kernel(hf_ref, hb_ref, w_ref, b_ref, o_ref):
    """logits = (h_fwd_last + h_bwd_last) @ W_fc + b_fc."""
    h = (hf_ref[...].astype(jnp.float32)
         + hb_ref[...].astype(jnp.float32)).astype(w_ref.dtype)
    o_ref[...] = jnp.dot(h, w_ref[...],
                         preferred_element_type=jnp.float32) + b_ref[...]


# ----------------------------------------------------------------------------
# Wrappers
# ----------------------------------------------------------------------------
def input_projection(x, w, b):
    rows, din = x.shape
    g6 = w.shape[-1]
    g3 = g6 // 2
    r_blk = _row_block(rows)
    return pl.pallas_call(
        proj_kernel,
        out_shape=(jax.ShapeDtypeStruct((rows, g3), jnp.float32),
                   jax.ShapeDtypeStruct((rows, g3), jnp.float32)),
        grid=(rows // r_blk,),
        in_specs=[
            pl.BlockSpec((r_blk, din), lambda i: (i, 0)),
            pl.BlockSpec((din, g6), lambda i: (0, 0)),
            pl.BlockSpec((1, g6), lambda i: (0, 0)),
        ],
        out_specs=(pl.BlockSpec((r_blk, g3), lambda i: (i, 0)),
                   pl.BlockSpec((r_blk, g3), lambda i: (i, 0))),
        compiler_params=pltpu.CompilerParams(
            dimension_semantics=("parallel",),
            vmem_limit_bytes=VMEM_LIMIT_BYTES),
    )(x, w, b)


def input_projection2(xf, xb, w, b):
    rows, hid = xf.shape
    g6 = w.shape[-1]
    g3 = g6 // 2
    r_blk = _row_block(rows)
    return pl.pallas_call(
        proj2_kernel,
        out_shape=(jax.ShapeDtypeStruct((rows, g3), jnp.float32),
                   jax.ShapeDtypeStruct((rows, g3), jnp.float32)),
        grid=(rows // r_blk,),
        in_specs=[
            pl.BlockSpec((r_blk, hid), lambda i: (i, 0)),
            pl.BlockSpec((r_blk, hid), lambda i: (i, 0)),
            pl.BlockSpec((2, hid, g6), lambda i: (0, 0, 0)),
            pl.BlockSpec((1, g6), lambda i: (0, 0)),
        ],
        out_specs=(pl.BlockSpec((r_blk, g3), lambda i: (i, 0)),
                   pl.BlockSpec((r_blk, g3), lambda i: (i, 0))),
        compiler_params=pltpu.CompilerParams(
            dimension_semantics=("parallel",),
            vmem_limit_bytes=VMEM_LIMIT_BYTES),
    )(xf, xb, w, b)


def gru_bidir_layer(gi_f, gi_b, w_hh, b_hh, out_dtype):
    seq, batch, g3 = gi_f.shape
    hid = w_hh.shape[1]
    t_blk = _time_block(seq)
    nblk = seq // t_blk
    return pl.pallas_call(
        gru_bidir_kernel,
        out_shape=(jax.ShapeDtypeStruct((seq, batch, hid), out_dtype),
                   jax.ShapeDtypeStruct((seq, batch, hid), out_dtype)),
        grid_spec=pltpu.PrefetchScalarGridSpec(
            num_scalar_prefetch=0,
            grid=(nblk,),
            in_specs=[
                pl.BlockSpec((t_blk, batch, g3), lambda t: (t, 0, 0)),
                pl.BlockSpec((t_blk, batch, g3),
                             lambda t: (nblk - 1 - t, 0, 0)),
                pl.BlockSpec((2, hid, g3), lambda t: (0, 0, 0)),
                pl.BlockSpec((2, g3), lambda t: (0, 0)),
            ],
            out_specs=(
                pl.BlockSpec((t_blk, batch, hid), lambda t: (t, 0, 0)),
                pl.BlockSpec((t_blk, batch, hid),
                             lambda t: (nblk - 1 - t, 0, 0)),
            ),
            scratch_shapes=[pltpu.VMEM((batch, hid), jnp.float32),
                            pltpu.VMEM((batch, hid), jnp.float32)],
        ),
        compiler_params=pltpu.CompilerParams(
            dimension_semantics=("arbitrary",),  # true time recurrence
            vmem_limit_bytes=VMEM_LIMIT_BYTES),
    )(gi_f, gi_b, w_hh, b_hh)


def classifier_head(h_f, h_b, w_fc, b_fc):
    batch = h_f.shape[0]
    classes = w_fc.shape[-1]
    return pl.pallas_call(
        head_kernel,
        out_shape=jax.ShapeDtypeStruct((batch, classes), jnp.float32),
        in_specs=[pl.BlockSpec(memory_space=pltpu.MemorySpace.VMEM)] * 4,
        out_specs=pl.BlockSpec(memory_space=pltpu.MemorySpace.VMEM),
    )(h_f, h_b, w_fc, b_fc)


def gru_classifier_forward(params, token_ids, compute_dtype=jnp.bfloat16):
    """Mirrors GRUClassifier.forward (phase2=True path)."""
    num_layers = params["num_layers"]
    hid = params["hidden_dim"]
    batch, seq = token_ids.shape

    # Embedding lookup, produced directly time-major: (S, B, E).
    # TODO(synk): arbitrary-row gather (nn.Embedding lookup) stays in plain
    # JAX; everything downstream (projections, recurrence, head) is Pallas.
    emb = params["embedding"][token_ids.T]

    xf = emb.reshape(seq * batch, -1).astype(compute_dtype)
    xb = None
    out_f = out_b = None
    for layer in range(num_layers):
        lp = params["gru"][layer]
        w_ih = lp["w_ih"].astype(compute_dtype)
        b_ih = lp["b_ih"].reshape(1, -1).astype(jnp.float32)
        w_hh = lp["w_hh"].astype(compute_dtype)
        b_hh = lp["b_hh"].astype(jnp.float32)
        if layer == 0:
            gi_f, gi_b = input_projection(xf, w_ih, b_ih)
        else:
            # (2H, 6H) -> (2, H, 6H): row halves multiply out_f / out_b.
            gi_f, gi_b = input_projection2(xf, xb,
                                           w_ih.reshape(2, hid, -1), b_ih)
        gi_f = gi_f.reshape(seq, batch, 3 * hid)
        gi_b = gi_b.reshape(seq, batch, 3 * hid)
        out_f, out_b = gru_bidir_layer(gi_f, gi_b, w_hh, b_hh,
                                       out_dtype=compute_dtype)
        xf = out_f.reshape(seq * batch, hid)
        xb = out_b.reshape(seq * batch, hid)

    # hidden.view(L, 2, B, H)[-1].sum(dim=0) @ W_fc + b_fc
    h_fwd_last = out_f[seq - 1]   # fwd state after t = S-1
    h_bwd_last = out_b[0]         # bwd state after t = 0 (full reverse pass)
    return classifier_head(h_fwd_last, h_bwd_last,
                           params["w_fc"].astype(compute_dtype),
                           params["b_fc"].reshape(1, -1).astype(jnp.float32))


# ----------------------------------------------------------------------------
# Pure-JAX reference (for checking the kernels)
# ----------------------------------------------------------------------------
def _bidir_gru_layer_ref(x_seq, w_ih, b_ih, w_hh, b_hh):
    seq, batch, _ = x_seq.shape
    hid = w_hh.shape[1]
    g3 = 3 * hid

    def run(xs, wih, bih, whh, bhh):
        def step(h, x_t):
            gi = x_t @ wih + bih
            gh = h @ whh + bhh
            r = jax.nn.sigmoid(gi[:, :hid] + gh[:, :hid])
            z = jax.nn.sigmoid(gi[:, hid:2 * hid] + gh[:, hid:2 * hid])
            n = jnp.tanh(gi[:, 2 * hid:] + r * gh[:, 2 * hid:])
            h_new = (1.0 - z) * n + z * h
            return h_new, h_new
        _, outs = jax.lax.scan(step, jnp.zeros((batch, hid), jnp.float32), xs)
        return outs

    out_f = run(x_seq, w_ih[:, :g3], b_ih[:g3], w_hh[0], b_hh[0])
    out_b = run(x_seq[::-1], w_ih[:, g3:], b_ih[g3:], w_hh[1], b_hh[1])[::-1]
    return out_f, out_b


def gru_classifier_forward_ref(params, token_ids):
    x = params["embedding"][token_ids.T].astype(jnp.float32)
    out_f = out_b = None
    for layer in range(params["num_layers"]):
        lp = params["gru"][layer]
        out_f, out_b = _bidir_gru_layer_ref(x, lp["w_ih"], lp["b_ih"],
                                            lp["w_hh"], lp["b_hh"])
        x = jnp.concatenate([out_f, out_b], axis=-1)
    h = out_f[-1] + out_b[0]
    return h @ params["w_fc"] + params["b_fc"]


# ----------------------------------------------------------------------------
# Deterministic parameter construction
# ----------------------------------------------------------------------------
def make_params(key, vocab_size, embedding_dim, hidden_dim, num_layers,
                num_classes):
    k = 1.0 / jnp.sqrt(hidden_dim)
    keys = jax.random.split(key, 2 + num_layers)
    params = {"num_layers": num_layers, "hidden_dim": hidden_dim}
    params["embedding"] = jax.random.normal(
        keys[0], (vocab_size, embedding_dim), jnp.float32)

    gru_layers = []
    for layer in range(num_layers):
        din = embedding_dim if layer == 0 else 2 * hidden_dim
        sub = jax.random.split(keys[2 + layer], 4)
        u = lambda kk, shape: jax.random.uniform(kk, shape, jnp.float32, -k, k)
        gru_layers.append(dict(
            # Stacked layouts, transposed vs. PyTorch.  Columns [0:3H] = fwd,
            # [3H:6H] = bwd; within each half gate order is r, z, n.
            w_ih=u(sub[0], (din, 6 * hidden_dim)),
            b_ih=u(sub[1], (6 * hidden_dim,)),
            # (direction, H, 3H) and (direction, 3H), direction 0 = fwd.
            w_hh=u(sub[2], (2, hidden_dim, 3 * hidden_dim)),
            b_hh=u(sub[3], (2, 3 * hidden_dim)),
        ))
    params["gru"] = gru_layers

    fck = jax.random.split(keys[1], 2)
    params["w_fc"] = jax.random.uniform(
        fck[0], (hidden_dim, num_classes), jnp.float32, -k, k)
    params["b_fc"] = jax.random.uniform(
        fck[1], (num_classes,), jnp.float32, -k, k)
    return params


# ----------------------------------------------------------------------------
if __name__ == "__main__":
    # Small shapes consistent with the module's forward.
    batch, seq = 2, 8
    vocab_size = 100
    embedding_dim = 16
    hidden_dim = 32
    num_layers = 2
    num_classes = 2

    key = jax.random.PRNGKey(0)
    kp, kt = jax.random.split(key)
    params = make_params(kp, vocab_size, embedding_dim, hidden_dim,
                         num_layers, num_classes)
    token_ids = jax.random.randint(kt, (batch, seq), 0, vocab_size, jnp.int32)

    ref = jax.block_until_ready(gru_classifier_forward_ref(params, token_ids))

    # f32 compute path: tight check against the pure-JAX reference.
    logits_f32 = jax.block_until_ready(
        gru_classifier_forward(params, token_ids, compute_dtype=jnp.float32))
    assert logits_f32.shape == (batch, num_classes)
    assert jnp.allclose(logits_f32, ref, rtol=2e-3, atol=2e-3)

    # bf16 matmul path (MXU-native, f32 state/accumulation): loose check.
    logits_bf16 = jax.block_until_ready(
        gru_classifier_forward(params, token_ids, compute_dtype=jnp.bfloat16))
    assert logits_bf16.shape == (batch, num_classes)
    assert jnp.allclose(logits_bf16, ref, rtol=5e-2, atol=5e-2)

    print("KERNEL_OK")
</pallas_src>

<mosaic_0001>
module attributes {stable_mosaic.version = 11 : i64} {
  func.func @proj_kernel(%arg0: i32, %arg1: memref<16x16xf32, #tpu.memory_space<vmem>>, %arg2: memref<16x192xf32, #tpu.memory_space<vmem>>, %arg3: memref<1x192xf32, #tpu.memory_space<vmem>>, %arg4: memref<16x96xf32, #tpu.memory_space<vmem>>, %arg5: memref<16x96xf32, #tpu.memory_space<vmem>>) attributes {dimension_semantics = [#tpu.dimension_semantics<parallel>], iteration_bounds = array<i64: 1>, scalar_prefetch = 0 : i64, scratch_operands = 0 : i64, tpu.core_type = #tpu.core_type<tc>, window_params = [{transform_indices = @transform_0, window_bounds = array<i64: 16, 16>}, {pipeline_mode = #tpu.pipeline_mode<synchronous>, transform_indices = @transform_1, window_bounds = array<i64: 16, 192>}, {pipeline_mode = #tpu.pipeline_mode<synchronous>, transform_indices = @transform_2, window_bounds = array<i64: 1, 192>}, {transform_indices = @transform_3, window_bounds = array<i64: 16, 96>}, {transform_indices = @transform_4, window_bounds = array<i64: 16, 96>}]} {
    %c0 = arith.constant 0 : index
    %c0_0 = arith.constant 0 : index
    %0 = vector.load %arg1[%c0, %c0_0] : memref<16x16xf32, #tpu.memory_space<vmem>>, vector<16x16xf32>
    %c0_1 = arith.constant 0 : index
    %c0_2 = arith.constant 0 : index
    %1 = vector.load %arg2[%c0_1, %c0_2] : memref<16x192xf32, #tpu.memory_space<vmem>>, vector<16x192xf32>
    %cst = arith.constant dense<0.000000e+00> : vector<16x192xf32>
    %2 = tpu.matmul %0, %1, %cst {dimension_numbers = #tpu.dot_dimension_numbers<[1], [0], [0], [1], [0, 0, 1, 1], [], []>} : vector<16x16xf32>, vector<16x192xf32>, vector<16x192xf32> -> vector<16x192xf32>
    %c0_3 = arith.constant 0 : index
    %c0_4 = arith.constant 0 : index
    %3 = vector.load %arg3[%c0_3, %c0_4] : memref<1x192xf32, #tpu.memory_space<vmem>>, vector<1x192xf32>
    %4 = vector.broadcast %3 : vector<1x192xf32> to vector<16x192xf32>
    %5 = arith.addf %2, %4 : vector<16x192xf32>
    %6 = vector.extract_strided_slice %5 {offsets = [0, 0], sizes = [16, 96], strides = [1, 1]} : vector<16x192xf32> to vector<16x96xf32>
    %c0_5 = arith.constant 0 : index
    %c0_6 = arith.constant 0 : index
    %7 = vector.load %arg4[%c0_5, %c0_6] : memref<16x96xf32, #tpu.memory_space<vmem>>, vector<16x96xf32>
    tpu.vector_store %arg4[%c0_5, %c0_6], %6 {strides = array<i32>} : memref<16x96xf32, #tpu.memory_space<vmem>>, vector<16x96xf32>,
    %8 = vector.extract_strided_slice %5 {offsets = [0, 96], sizes = [16, 96], strides = [1, 1]} : vector<16x192xf32> to vector<16x96xf32>
    %c0_7 = arith.constant 0 : index
    %c0_8 = arith.constant 0 : index
    %9 = vector.load %arg5[%c0_7, %c0_8] : memref<16x96xf32, #tpu.memory_space<vmem>>, vector<16x96xf32>
    tpu.vector_store %arg5[%c0_7, %c0_8], %8 {strides = array<i32>} : memref<16x96xf32, #tpu.memory_space<vmem>>, vector<16x96xf32>,
    return
  }
  func.func @transform_0(%arg0: i32) -> (i32, i32) {
    %c0_i32 = arith.constant 0 : i32
    %c0_i32_0 = arith.constant 0 : i32
    return %arg0, %c0_i32 : i32, i32
  }
  func.func @transform_1(%arg0: i32) -> (i32, i32) {
    %c0_i32 = arith.constant 0 : i32
    %c0_i32_0 = arith.constant 0 : i32
    %c0_i32_1 = arith.constant 0 : i32
    return %c0_i32, %c0_i32_0 : i32, i32
  }
  func.func @transform_2(%arg0: i32) -> (i32, i32) {
    %c0_i32 = arith.constant 0 : i32
    %c0_i32_0 = arith.constant 0 : i32
    %c0_i32_1 = arith.constant 0 : i32
    return %c0_i32, %c0_i32_0 : i32, i32
  }
  func.func @transform_3(%arg0: i32) -> (i32, i32) {
    %c0_i32 = arith.constant 0 : i32
    %c0_i32_0 = arith.constant 0 : i32
    return %arg0, %c0_i32 : i32, i32
  }
  func.func @transform_4(%arg0: i32) -> (i32, i32) {
    %c0_i32 = arith.constant 0 : i32
    %c0_i32_0 = arith.constant 0 : i32
    return %arg0, %c0_i32 : i32, i32
  }
}

</mosaic_0001>

<llo_original>
// kernel: tpu_custom_call.1
$region0: #{tpu_custom_call.1}
  #allocation0 [shape = 'u32[]', space=smem, size = 0x4, offset = 0x4, fixed_abs, tag = 'smem constant byte address 0x4 - core index']
  #allocation1 [shape = 'u32[144,128]{1,0:T(1,128)}', space=vmem, size = 0x12000, scoped, tag = 'internal scratch']
  %s0 = inlined_call_operand.hbm [shape: f32[16,16], index: 0, kind: input, shape index: {}]
  %s1 = inlined_call_operand.hbm [shape: f32[16,192], index: 1, kind: input, shape index: {}]
  %s2 = inlined_call_operand.vmem [shape: f32[1,192], index: 2, kind: input, shape index: {}]
  %s3 = inlined_call_operand.hbm [shape: f32[16,96], index: 3, kind: output, shape index: {0}]
  %s4 = inlined_call_operand.hbm [shape: f32[16,96], index: 4, kind: output, shape index: {1}]
  %5 = xla_tuple %s3, %s4
  %s6 = sld [smem:[#allocation0]]
  $region38: #{tpu_custom_call.1} parent=0
    _
  %s8 = ssub.s32 1, %s6
  %s9 = scalar_select 0, %s8, %s6
  $region1: #{tpu_custom_call.1} parent=0
    #allocation2 [shape = 'u8[8192]{0}', space=vmem, size = 0x2000, scoped, tag = 'input window, operand 0, single buffered']
    #allocation3 [shape = 's32[1]{0}', space=sflag, size = 0x4, scoped, tag = 'scoped memory for tpu_custom_call.1']
    #allocation4 [shape = 's32[1]{0}', space=sflag, size = 0x4, scoped, tag = 'scoped memory for tpu_custom_call.1']
    #allocation5 [shape = 'u8[16384]{0}', space=vmem, size = 0x4000, scoped, tag = 'input window, operand 1, single buffered']
    #allocation6 [shape = 's32[1]{0}', space=sflag, size = 0x4, scoped, tag = 'scoped memory for tpu_custom_call.1']
    #allocation7 [shape = 'u8[8192]{0}', space=vmem, size = 0x2000, scoped, tag = 'output window, operand 0, single buffered']
    #allocation8 [shape = 'u8[8192]{0}', space=vmem, size = 0x2000, scoped, tag = 'output window, operand 1, single buffered']
    #allocation9 [shape = 's32[1]{0}', space=sflag, size = 0x4, scoped, tag = 'scoped memory for tpu_custom_call.1']
    %10 = vsyncpa [#allocation3], 0
    %11 = vsyncpa [#allocation6], 0
    %12 = vsyncpa [#allocation4], 0
    %13 = vsyncpa [#allocation9], 0
    // Predicated region
    $region2: #{tpu_custom_call.1} parent=1 // pred_check
      _
    $region3: #{tpu_custom_call.1} parent=1 // pred_check_branch
      %15 = sbr.rel (0) target = $region5
    $region4: #{tpu_custom_call.1} parent=1 // pred_region
      %s17 = ssub.s32 256, 256
      %18 = vsyncadd [#allocation3], %s17
      %s19 = sshll.u32 [#allocation2], 4
      %s20 = int_to_ptr.vmem [resolvable:$true] %s19
      %25 = dma.hbm_to_vmem [thread:$0]  %s0, 256, %s20, [#allocation3], 128, 128, 8
    $region5: #{tpu_custom_call.1} parent=1 // pred_fallthru
      _
    // Predicated region
    $region6: #{tpu_custom_call.1} parent=1 // pred_check
      _
    $region7: #{tpu_custom_call.1} parent=1 // pred_check_branch
      %27 = sbr.rel (0) target = $region9
    $region8: #{tpu_custom_call.1} parent=1 // pred_region
      %s29 = ssub.s32 512, 512
      %30 = vsyncadd [#allocation6], %s29
      %s31 = sshll.u32 [#allocation5], 4
      %s32 = int_to_ptr.vmem [resolvable:$true] %s31
      %37 = dma.hbm_to_vmem [thread:$0]  %s1, 512, %s32, [#allocation6], 256, 256, 16
    $region9: #{tpu_custom_call.1} parent=1 // pred_fallthru
      _
    // Predicated region
    $region10: #{tpu_custom_call.1} parent=1 // pred_check
      _
    $region11: #{tpu_custom_call.1} parent=1 // pred_check_branch
      %39 = sbr.rel (0) target = $region13
    $region12: #{tpu_custom_call.1} parent=1 // pred_region
      _
    $region13: #{tpu_custom_call.1} parent=1 // pred_fallthru
      _
    // Predicated region
    $region14: #{tpu_custom_call.1} parent=1 // pred_check
      _
    $region15: #{tpu_custom_call.1} parent=1 // pred_check_branch
      %41 = sbr.rel (0) target = $region17
    $region16: #{tpu_custom_call.1} parent=1 // pred_region
      %42 = dma.done [#allocation3], 256
    $region17: #{tpu_custom_call.1} parent=1 // pred_fallthru
      _
    // Predicated region
    $region18: #{tpu_custom_call.1} parent=1 // pred_check
      _
    $region19: #{tpu_custom_call.1} parent=1 // pred_check_branch
      %44 = sbr.rel (0) target = $region21
    $region20: #{tpu_custom_call.1} parent=1 // pred_region
      %45 = dma.done [#allocation6], 512
    $region21: #{tpu_custom_call.1} parent=1 // pred_fallthru
      _
    %v46 = vld [vmem:[#allocation2] sm:$0xff]
    %v47 = vld [vmem:[#allocation2 + $0x8] sm:$0xff]
    %v48 = vld [vmem:[#allocation5] sm:$0xff]
    %v49 = vld [vmem:[#allocation5 + $0x8] sm:$0xff]
    %v50 = vld [vmem:[#allocation5 + $0x10] sm:$0xff]
    %v51 = vld [vmem:[#allocation5 + $0x18] sm:$0xff]
    %v52 = vld [vmem:[%s2] sm:$0x3]
    %v54 = vlaneseq
    %v55 = vshrl.u32 %v54, 7
    %v56 = vsub.s32 0, %v55
    %v57 = vrot.slane %v52, %v56
    %v58 = vlaneseq
    %v59 = vshrl.u32 %v58, 7
    %v60 = vsub.s32 1, %v59
    %v61 = vrot.slane %v52, %v60
    %vm64 = vcmask 130048
    %v66 = vsel %vm64, %v46, 0
    %v69 = vsel %vm64, %v47, 0
    %71 = vmatprep.subr.mxu0 0.0
    %72 = vmatpush1.msra.mxu0 0.0
    %73 = vmatprep.subr.mxu0 0.0
    %74 = vmatpush1.msra.mxu0 0.0
    %75 = vmatprep.subr.mxu0 0.0
    %76 = vmatpush1.msra.mxu0 0.0
    %77 = vmatprep.subr.mxu0 0.0
    %78 = vmatpush1.msra.mxu0 0.0
    %79 = vmatprep.subr.mxu0 0.0
    %80 = vmatpush1.msra.mxu0 0.0
    %81 = vmatprep.subr.mxu0 0.0
    %82 = vmatpush1.msra.mxu0 0.0
    %83 = vmatprep.subr.mxu0 0.0
    %84 = vmatpush1.msra.mxu0 0.0
    %85 = vmatprep.subr.mxu0 0.0
    %86 = vmatpush1.msra.mxu0 0.0
    %87 = vmatprep.subr.mxu0 0.0
    %88 = vmatpush1.msra.mxu0 0.0
    %89 = vmatprep.subr.mxu0 0.0
    %90 = vmatpush1.msra.mxu0 0.0
    %91 = vmatprep.subr.mxu0 0.0
    %92 = vmatpush1.msra.mxu0 0.0
    %93 = vmatprep.subr.mxu0 0.0
    %94 = vmatpush1.msra.mxu0 0.0
    %95 = vmatprep.subr.mxu0 0.0
    %96 = vmatpush1.msra.mxu0 0.0
    %97 = vmatprep.subr.mxu0 0.0
    %98 = vmatpush1.msra.mxu0 0.0
    %99 = vmatprep.subr.mxu0 %v51
    %100 = vmatpush1.msra.mxu0 %v50
    %101 = vmatprep.subr.mxu0 %v49
    %102 = vmatpush1.msra.mxu0 %v48
    %103 = vmatprep.subr.mxu0 0.0
    %104 = vmatpush2.msra.mxu0 0.0
    %105 = vmatprep.subr.mxu0 0.0
    %106 = vmatpush2.msra.mxu0 0.0
    %107 = vmatprep.subr.mxu0 0.0
    %108 = vmatpush2.msra.mxu0 0.0
    %109 = vmatprep.subr.mxu0 0.0
    %110 = vmatpush2.msra.mxu0 0.0
    %111 = vmatprep.subr.mxu0 0.0
    %112 = vmatpush2.msra.mxu0 0.0
    %113 = vmatprep.subr.mxu0 0.0
    %114 = vmatpush2.msra.mxu0 0.0
    %115 = vmatprep.subr.mxu0 0.0
    %116 = vmatpush2.msra.mxu0 0.0
    %117 = vmatprep.subr.mxu0 0.0
    %118 = vmatpush2.msra.mxu0 0.0
    %119 = vmatprep.subr.mxu0 0.0
    %120 = vmatpush2.msra.mxu0 0.0
    %121 = vmatprep.subr.mxu0 0.0
    %122 = vmatpush2.msra.mxu0 0.0
    %123 = vmatprep.subr.mxu0 0.0
    %124 = vmatpush2.msra.mxu0 0.0
    %125 = vmatprep.subr.mxu0 0.0
    %126 = vmatpush2.msra.mxu0 0.0
    %127 = vmatprep.subr.mxu0 0.0
    %128 = vmatpush2.msra.mxu0 0.0
    %129 = vmatprep.subr.mxu0 0.0
    %130 = vmatpush2.msra.mxu0 0.0
    %131 = vmatprep.subr.mxu0 0.0
    %132 = vmatpush2.msra.mxu0 0.0
    %133 = vmatprep.subr.mxu0 0.0
    %134 = vmatpush2.msra.mxu0 0.0
    %135 = vmatprep.mubr.f32.mxu0 0.0
    %136 = vmatmul.mubr.f32.gmra.mxu0 %v66
    %v137 = vpop.f32.mrf.mxu0
    %v138 = vadd.f32 %v57, %v137
    %v139 = vpop.f32.mrf.mxu0
    %v140 = vadd.f32 %v61, %v139
    %141 = vmatprep.mubr.f32.mxu0 0.0
    %142 = vmatmul.mubr.f32.gmra.mxu0 %v69
    %v143 = vpop.f32.mrf.mxu0
    %v144 = vadd.f32 %v57, %v143
    %v145 = vpop.f32.mrf.mxu0
    %v146 = vadd.f32 %v61, %v145
    %147 = vdwg.mxu0
    %vm148 = vcmask 785408
    %149 = vst.msk [vmem:[#allocation7] sm:$0xff] %vm148, %v138
    %150 = vst.msk [vmem:[#allocation7 + $0x8] sm:$0xff] %vm148, %v144
    %155 = vrot.lane.b32.xlu0 %v138, 32
    %v156 = vpop.permute.xlu0 %155
    %157 = vrot.lane.b32.xlu0 %v140, 32
    %v158 = vpop.permute.xlu0 %157
    %159 = vrot.lane.b32.xlu0 %v144, 32
    %v160 = vpop.permute.xlu0 %159
    %161 = vrot.lane.b32.xlu0 %v146, 32
    %v162 = vpop.permute.xlu0 %161
    %vm163 = vcmask 261120
    %v164 = vsel %vm163, %v156, %v158
    %v165 = vsel %vm163, %v160, %v162
    %168 = vst.msk [vmem:[#allocation8] sm:$0xff] %vm148, %v164
    %169 = vst.msk [vmem:[#allocation8 + $0x8] sm:$0xff] %vm148, %v165
    // Predicated region
    $region22: #{tpu_custom_call.1} parent=1 // pred_check
      _
    $region23: #{tpu_custom_call.1} parent=1 // pred_check_branch
      %171 = sbr.rel (0) target = $region25
    $region24: #{tpu_custom_call.1} parent=1 // pred_region
      %s173 = ssub.s32 256, 256
      %174 = vsyncadd [#allocation4], %s173
      %s175 = sshll.u32 [#allocation7], 4
      %s176 = int_to_ptr.vmem [resolvable:$true] %s175
      %181 = dma.vmem_to_hbm [thread:$0]  %s176, 256, %s3, [#allocation4], 128, 128, 8
    $region25: #{tpu_custom_call.1} parent=1 // pred_fallthru
      _
    // Predicated region
    $region26: #{tpu_custom_call.1} parent=1 // pred_check
      _
    $region27: #{tpu_custom_call.1} parent=1 // pred_check_branch
      %183 = sbr.rel (0) target = $region29
    $region28: #{tpu_custom_call.1} parent=1 // pred_region
      %s185 = ssub.s32 256, 256
      %186 = vsyncadd [#allocation9], %s185
      %s187 = sshll.u32 [#allocation8], 4
      %s188 = int_to_ptr.vmem [resolvable:$true] %s187
      %193 = dma.vmem_to_hbm [thread:$0]  %s188, 256, %s4, [#allocation9], 128, 128, 8
    $region29: #{tpu_custom_call.1} parent=1 // pred_fallthru
      _
    // Predicated region
    $region30: #{tpu_custom_call.1} parent=1 // pred_check
      _
    $region31: #{tpu_custom_call.1} parent=1 // pred_check_branch
      %195 = sbr.rel (0) target = $region33
    $region32: #{tpu_custom_call.1} parent=1 // pred_region
      %196 = dma.done [#allocation4], 256
    $region33: #{tpu_custom_call.1} parent=1 // pred_fallthru
      _
    // Predicated region
    $region34: #{tpu_custom_call.1} parent=1 // pred_check
      _
    $region35: #{tpu_custom_call.1} parent=1 // pred_check_branch
      %198 = sbr.rel (0) target = $region37
    $region36: #{tpu_custom_call.1} parent=1 // pred_region
      %199 = dma.done [#allocation9], 256
    $region37: #{tpu_custom_call.1} parent=1 // pred_fallthru
      _
    %200 = vsyncpa [#allocation3], 1
    %201 = vsyncpa [#allocation6], 1
    %202 = vsyncpa [#allocation4], 1
    %203 = vsyncpa [#allocation9], 1

</llo_original>
